<compile_context>
chip_gen: v5e
topology: v5e:2x2
jax: 0.10.0
libtpu: 0.0.40
codegen_flags: <defaults>
</compile_context>

<pallas_src>
import math

import jax
import jax.numpy as jnp
from jax.experimental import pallas as pl
from jax.experimental.pallas import tpu as pltpu

LEAKY_ALPHA = 0.2
NEG_INF = -1e30


def _round_up(x, m):
    return ((x + m - 1) // m) * m


def _vmem_capacity_bytes():
    """Per-core VMEM capacity (generation-aware), with a conservative fallback."""
    try:
        cap = getattr(pltpu.get_tpu_info(), "vmem_capacity_bytes", None)
        if cap:
            return int(cap)
    except Exception:
        pass
    return 64 << 20  # v7x per-TensorCore VMEM (most conservative)


# --------------------------------------------------------------------------
# Kernel 1: row-tiled projection.
#   W_aug columns [0:fout] = W, column fp-2 = W @ a_l, column fp-1 = W @ a_r,
#   so one matmul produces h plus both per-node scores.
# --------------------------------------------------------------------------
def proj_kernel(x_ref, w_ref, h_ref, sc_ref):
    # x_ref: (TMp, Fin) f32       row tile of node features
    # w_ref: (Fin, Fp)  f32       augmented weight (resident)
    # h_ref: (TMp, Fp)  bf16      projected features (+score cols; sliced later)
    # sc_ref:(TMp, 128) f32       lane-dense copy of the last 128 columns
    #                             (keeps the attention scores in full f32)
    hf = jnp.dot(x_ref[...], w_ref[...], preferred_element_type=jnp.float32)
    h_ref[...] = hf.astype(jnp.bfloat16)
    sc_ref[...] = hf[:, hf.shape[1] - 128:]


# --------------------------------------------------------------------------
# Kernel 2: column-tiled online-softmax + bf16 spmm (flash-style accumulator).
# --------------------------------------------------------------------------
def attn_kernel(adj_ref, ssrc_ref, sdst_ref, h_ref, out_ref, m_sc, l_sc, acc_sc):
    # adj_ref: (TM, TN) int8   0/1 edge mask block (source rows i, dest cols j)
    # ssrc_ref:(TM, 1)  f32    a_l . h[i] for this row block
    # sdst_ref:(1, TN)  f32    a_r . h[j] for this column block
    # h_ref:   (TN, Fp) bf16   projected features, column block
    # out_ref: (TM, Fp) f32    output row block (written at the last column step)
    # m_sc/l_sc: (TM,1) f32, acc_sc: (TM,Fp) f32  online-softmax state
    j = pl.program_id(1)

    @pl.when(j == 0)
    def _():
        m_sc[...] = jnp.full(m_sc.shape, NEG_INF, dtype=m_sc.dtype)
        l_sc[...] = jnp.zeros(l_sc.shape, dtype=l_sc.dtype)
        acc_sc[...] = jnp.zeros(acc_sc.shape, dtype=acc_sc.dtype)

    # e[i, j] = a_l.h[i] + a_r.h[j], LeakyReLU, one mask select.
    e = ssrc_ref[...] + sdst_ref[...]                       # (TM, TN)
    e = jnp.maximum(e, LEAKY_ALPHA * e)                     # LeakyReLU (alpha<1)
    masked_e = jnp.where(adj_ref[...] > 0, e, NEG_INF)      # single select

    m_prev = m_sc[...]
    m_new = jnp.maximum(m_prev, jnp.max(masked_e, axis=1, keepdims=True))
    m_sc[...] = m_new
    # Clamp the exp reference so all-masked rows stay finite; masked logits
    # still underflow to exactly 0 (no second per-element select needed).
    m_use = jnp.maximum(m_new, 0.5 * NEG_INF)
    corr = jnp.exp(jnp.maximum(m_prev, 0.5 * NEG_INF) - m_use)   # (TM,1) in (0,1]

    p = jnp.exp(masked_e - m_use)                           # (TM, TN), 0 off-edge
    l_sc[...] = corr * l_sc[...] + jnp.sum(p, axis=1, keepdims=True)
    acc_sc[...] = corr * acc_sc[...] + jnp.dot(
        p.astype(jnp.bfloat16), h_ref[...],
        preferred_element_type=jnp.float32)                 # native bf16 MXU spmm

    @pl.when(j == pl.num_programs(1) - 1)
    def _():
        denom = l_sc[...] + 1e-16
        inv = pl.reciprocal(denom, approx=True)
        inv = inv * (2.0 - denom * inv)      # one Newton step -> f32 accuracy
        out_ref[...] = acc_sc[...] * inv


# --------------------------------------------------------------------------
# Tile policy (VMEM-budget derived, generation aware)
# --------------------------------------------------------------------------
def _attn_step_bytes(tm, tn, fp):
    """Rough per-grid-step VMEM footprint of the attention kernel."""
    return int(
        2 * tm * tn * 1              # int8 adj tile (double-buffered)
        + 2 * tn * fp * 2            # bf16 h column tile (double-buffered)
        + 2 * (tm + tn) * 4          # s_src / s_dst tiles
        + 2 * tm * fp * 4            # f32 output tile (double-buffered)
        + tm * fp * 4 + 4 * tm * 4   # acc / m / l scratch
        + 4 * tm * tn * 4            # f32 temporaries over the score block
    )


def _select_tiles(n, fp, budget, tm_target=None, tn_target=None):
    n128 = _round_up(max(n, 1), 128)
    if tm_target is not None and tn_target is not None:
        assert tm_target % 128 == 0 and tn_target % 128 == 0
        tm, tn = tm_target, tn_target
    else:
        cands = [c for c in (512, 256, 128) if c <= n128] or [128]
        tm, tn = 128, 128
        found = False
        for cm in cands:                 # prefer large row tiles (amortize per-step
            for cn in cands:             # overhead, bigger adj DMA streams)
                if _attn_step_bytes(cm, cn, fp) <= budget:
                    tm, tn, found = cm, cn, True
                    break
            if found:
                break
    lcm = (tm * tn) // math.gcd(tm, tn)
    n_pad = _round_up(n, lcm)
    # Keep the "parallel" row-block count even when possible (v7x: 2 TensorCores).
    if (n_pad // tm) % 2 == 1 and tm % 256 == 0:
        tm //= 2
        lcm = (tm * tn) // math.gcd(tm, tn)
        n_pad = _round_up(n, lcm)
    return tm, tn, n_pad


# --------------------------------------------------------------------------
# Wrapper
# --------------------------------------------------------------------------
def gat_one_head(x, w, a, adj, *, tm_target=None, tn_target=None):
    """Single-head GAT forward (eval mode).

    x:   (N, Fin) node features
    w:   (Fin, Fout) linear weight
    a:   (1, 2*Fout) attention vector
    adj: (N, N) dense edge mask, adj[i, j] != 0 iff edge (i -> j) exists
    """
    n, fin = x.shape
    fout = w.shape[1]
    assert a.shape == (1, 2 * fout)
    assert adj.shape == (n, n)

    # Lane-dense feature padding + 2 spare columns for the folded scores.
    fp = _round_up(fout + 2, 128)

    vmem_cap = _vmem_capacity_bytes()
    vmem_limit = int(0.8 * vmem_cap)
    tm, tn, n_pad = _select_tiles(n, fp, int(0.45 * vmem_cap),
                                  tm_target, tn_target)
    grid_m = n_pad // tm
    grid_n = n_pad // tn

    # Projection-kernel row tile: largest of (512, 256, 128) dividing n_pad.
    tm_p = 128
    for c in (512, 256):
        if n_pad % c == 0:
            tm_p = c
            break

    x32 = x.astype(jnp.float32)
    w32 = w.astype(jnp.float32)
    a32 = a.astype(jnp.float32)

    # ---- pad / augment inputs (XLA side) ---------------------------------
    x_p = jnp.zeros((n_pad, fin), jnp.float32).at[:n, :].set(x32)
    w_aug = jnp.zeros((fin, fp), jnp.float32)
    w_aug = w_aug.at[:, :fout].set(w32)
    w_aug = w_aug.at[:, fp - 2].set(w32 @ a32[0, :fout])   # -> s_src = a_l . h
    w_aug = w_aug.at[:, fp - 1].set(w32 @ a32[0, fout:])   # -> s_dst = a_r . h
    adj_i8 = jnp.zeros((n_pad, n_pad), jnp.int8).at[:n, :n].set(
        (adj > 0).astype(jnp.int8))

    # ---- kernel 1: h (bf16) + per-node scores (f32) in one matmul ---------
    h_bf16, sc = pl.pallas_call(
        proj_kernel,
        grid=(n_pad // tm_p,),
        in_specs=[
            pl.BlockSpec((tm_p, fin), lambda i: (i, 0)),     # x row tile
            pl.BlockSpec((fin, fp), lambda i: (0, 0)),       # W_aug (resident)
        ],
        out_specs=[
            pl.BlockSpec((tm_p, fp), lambda i: (i, 0)),      # h (bf16)
            pl.BlockSpec((tm_p, 128), lambda i: (i, 0)),     # score cols (f32)
        ],
        out_shape=[
            jax.ShapeDtypeStruct((n_pad, fp), jnp.bfloat16),
            jax.ShapeDtypeStruct((n_pad, 128), jnp.float32),
        ],
        compiler_params=pltpu.CompilerParams(
            dimension_semantics=("parallel",)),
    )(x_p, w_aug)

    # Score columns sit at lanes 126 / 127 of the (n_pad, 128) block.
    s_src = sc[:, 126:127]                           # (n_pad, 1) f32, a_l . h[i]
    s_dst = sc[:, 127:128].reshape(1, n_pad)         # (1, n_pad) f32, a_r . h[j]

    # ---- kernel 2: column-tiled online-softmax + bf16 spmm ----------------
    out_p = pl.pallas_call(
        attn_kernel,
        grid=(grid_m, grid_n),
        in_specs=[
            pl.BlockSpec((tm, tn), lambda i, j: (i, j)),     # adj tile (int8)
            pl.BlockSpec((tm, 1), lambda i, j: (i, 0)),      # s_src row tile
            pl.BlockSpec((1, tn), lambda i, j: (0, j)),      # s_dst col tile
            pl.BlockSpec((tn, fp), lambda i, j: (j, 0)),     # h col tile (bf16)
        ],
        out_specs=pl.BlockSpec((tm, fp), lambda i, j: (i, 0)),
        out_shape=jax.ShapeDtypeStruct((n_pad, fp), jnp.float32),
        scratch_shapes=[
            pltpu.VMEM((tm, 1), jnp.float32),                # running max m
            pltpu.VMEM((tm, 1), jnp.float32),                # running denom l
            pltpu.VMEM((tm, fp), jnp.float32),               # acc
        ],
        compiler_params=pltpu.CompilerParams(
            dimension_semantics=("parallel", "arbitrary"),
            vmem_limit_bytes=vmem_limit,
        ),
    )(adj_i8, s_src, s_dst, h_bf16)

    return out_p[:n, :fout]


# --------------------------------------------------------------------------
# Reference + driver
# --------------------------------------------------------------------------
def xavier_normal(key, shape, gain):
    fan_in, fan_out = shape[0], shape[1]
    std = gain * math.sqrt(2.0 / (fan_in + fan_out))
    return std * jax.random.normal(key, shape, dtype=jnp.float32)


def reference_forward(x, w, a, adj):
    """Pure-JAX f32 reference of the dense-masked GAT forward."""
    fout = w.shape[1]
    h = x @ w
    s_src = h @ a[0, :fout]
    s_dst = h @ a[0, fout:]
    e = s_src[:, None] + s_dst[None, :]
    e = jnp.where(e >= 0.0, e, LEAKY_ALPHA * e)
    mask = adj > 0
    masked_e = jnp.where(mask, e, NEG_INF)
    row_max = jnp.max(masked_e, axis=1, keepdims=True)
    row_max = jnp.where(row_max <= NEG_INF * 0.5, 0.0, row_max)
    p = jnp.where(mask, jnp.exp(e - row_max), 0.0)
    attn = p / (jnp.sum(p, axis=1, keepdims=True) + 1e-16)
    return attn @ h


if __name__ == "__main__":
    key = jax.random.PRNGKey(0)
    k_x, k_w, k_a, k_adj = jax.random.split(key, 4)

    N = 300               # with auto tiles (256, 256): n_pad=512, grid=(2, 2)
                          # -> exercises row tiling, multi-block online softmax,
                          # and padded (empty) rows / columns.
    IN_FEATURES = 32
    OUT_FEATURES = 32     # padded to 128 lanes (+2 folded score columns)
    gain = math.sqrt(2.0)  # nn.init.calculate_gain('relu')

    w = xavier_normal(k_w, (IN_FEATURES, OUT_FEATURES), gain)     # (Fin, Fout)
    a = xavier_normal(k_a, (1, 2 * OUT_FEATURES), gain)           # (1, 2*Fout)

    x = jax.random.normal(k_x, (N, IN_FEATURES), dtype=jnp.float32)
    # random sparse adjacency (dense 0/1 mask) with self-loops
    adj = (jax.random.uniform(k_adj, (N, N)) < 0.05).astype(jnp.float32)
    adj = jnp.maximum(adj, jnp.eye(N, dtype=jnp.float32))

    out = gat_one_head(x, w, a, adj)
    out = jax.block_until_ready(out)

    ref = reference_forward(x, w, a, adj)
    assert out.shape == (N, OUT_FEATURES)
    max_err = float(jnp.max(jnp.abs(out - ref)))
    # h and the softmax probabilities pass through bf16 for the MXU spmm, so
    # the tolerance is looser than the previous pure-f32 version (~1e-2).
    assert jnp.allclose(out, ref, atol=5e-2, rtol=5e-2), (
        f"mismatch vs reference (max abs err {max_err})")

    print("KERNEL_OK")
</pallas_src>

<mosaic_0001>
module attributes {stable_mosaic.version = 11 : i64} {
  func.func @proj_kernel(%arg0: i32, %arg1: memref<512x32xf32, #tpu.memory_space<vmem>>, %arg2: memref<32x128xf32, #tpu.memory_space<vmem>>, %arg3: memref<512x128xbf16, #tpu.memory_space<vmem>>, %arg4: memref<512x128xf32, #tpu.memory_space<vmem>>) attributes {dimension_semantics = [#tpu.dimension_semantics<parallel>], iteration_bounds = array<i64: 1>, scalar_prefetch = 0 : i64, scratch_operands = 0 : i64, tpu.core_type = #tpu.core_type<tc>, window_params = [{transform_indices = @transform_0, window_bounds = array<i64: 512, 32>}, {pipeline_mode = #tpu.pipeline_mode<synchronous>, transform_indices = @transform_1, window_bounds = array<i64: 32, 128>}, {transform_indices = @transform_2, window_bounds = array<i64: 512, 128>}, {transform_indices = @transform_3, window_bounds = array<i64: 512, 128>}]} {
    %c0 = arith.constant 0 : index
    %c0_0 = arith.constant 0 : index
    %0 = vector.load %arg1[%c0, %c0_0] : memref<512x32xf32, #tpu.memory_space<vmem>>, vector<512x32xf32>
    %c0_1 = arith.constant 0 : index
    %c0_2 = arith.constant 0 : index
    %1 = vector.load %arg2[%c0_1, %c0_2] : memref<32x128xf32, #tpu.memory_space<vmem>>, vector<32x128xf32>
    %cst = arith.constant dense<0.000000e+00> : vector<512x128xf32>
    %2 = tpu.matmul %0, %1, %cst {dimension_numbers = #tpu.dot_dimension_numbers<[1], [0], [0], [1], [0, 0, 1, 1], [], []>} : vector<512x32xf32>, vector<32x128xf32>, vector<512x128xf32> -> vector<512x128xf32>
    %3 = arith.truncf %2 : vector<512x128xf32> to vector<512x128xbf16>
    %c0_3 = arith.constant 0 : index
    %c0_4 = arith.constant 0 : index
    %4 = vector.load %arg3[%c0_3, %c0_4] : memref<512x128xbf16, #tpu.memory_space<vmem>>, vector<512x128xbf16>
    tpu.vector_store %arg3[%c0_3, %c0_4], %3 {strides = array<i32>} : memref<512x128xbf16, #tpu.memory_space<vmem>>, vector<512x128xbf16>,
    %c0_5 = arith.constant 0 : index
    %c0_6 = arith.constant 0 : index
    %5 = vector.load %arg4[%c0_5, %c0_6] : memref<512x128xf32, #tpu.memory_space<vmem>>, vector<512x128xf32>
    tpu.vector_store %arg4[%c0_5, %c0_6], %2 {strides = array<i32>} : memref<512x128xf32, #tpu.memory_space<vmem>>, vector<512x128xf32>,
    return
  }
  func.func @transform_0(%arg0: i32) -> (i32, i32) {
    %c0_i32 = arith.constant 0 : i32
    %c0_i32_0 = arith.constant 0 : i32
    return %arg0, %c0_i32 : i32, i32
  }
  func.func @transform_1(%arg0: i32) -> (i32, i32) {
    %c0_i32 = arith.constant 0 : i32
    %c0_i32_0 = arith.constant 0 : i32
    %c0_i32_1 = arith.constant 0 : i32
    return %c0_i32, %c0_i32_0 : i32, i32
  }
  func.func @transform_2(%arg0: i32) -> (i32, i32) {
    %c0_i32 = arith.constant 0 : i32
    %c0_i32_0 = arith.constant 0 : i32
    return %arg0, %c0_i32 : i32, i32
  }
  func.func @transform_3(%arg0: i32) -> (i32, i32) {
    %c0_i32 = arith.constant 0 : i32
    %c0_i32_0 = arith.constant 0 : i32
    return %arg0, %c0_i32 : i32, i32
  }
}

</mosaic_0001>

<llo_original>
// kernel: tpu_custom_call.1
$region0: #{tpu_custom_call.1}
  #allocation0 [shape = 'u32[]', space=smem, size = 0x4, offset = 0x4, fixed_abs, tag = 'smem constant byte address 0x4 - core index']
  #allocation1 [shape = 'u32[72,128]{1,0:T(1,128)}', space=vmem, size = 0x9000, scoped, tag = 'internal scratch']
  %s0 = inlined_call_operand.vmem [shape: f32[512,32], index: 0, kind: input, shape index: {}]
  %s1 = inlined_call_operand.vmem [shape: f32[32,128], index: 1, kind: input, shape index: {}]
  %s2 = inlined_call_operand.hbm [shape: bf16[512,128], index: 2, kind: output, shape index: {0}]
  %s3 = inlined_call_operand.hbm [shape: f32[512,128], index: 3, kind: output, shape index: {1}]
  %4 = xla_tuple %s2, %s3
  %s5 = sld [smem:[#allocation0]]
  $region26: #{tpu_custom_call.1} parent=0
    _
  %s7 = ssub.s32 1, %s5
  %s8 = scalar_select 0, %s7, %s5
  $region1: #{tpu_custom_call.1} parent=0
    #allocation2 [shape = 'u8[131072]{0}', space=vmem, size = 0x20000, scoped, tag = 'output window, operand 0, single buffered']
    #allocation3 [shape = 's32[1]{0}', space=sflag, size = 0x4, scoped, tag = 'scoped memory for tpu_custom_call.1']
    #allocation4 [shape = 'u8[262144]{0}', space=vmem, size = 0x40000, scoped, tag = 'output window, operand 1, single buffered']
    #allocation5 [shape = 's32[1]{0}', space=sflag, size = 0x4, scoped, tag = 'scoped memory for tpu_custom_call.1']
    %9 = vsyncpa [#allocation3], 0
    %10 = vsyncpa [#allocation5], 0
    // Predicated region
    $region2: #{tpu_custom_call.1} parent=1 // pred_check
      _
    $region3: #{tpu_custom_call.1} parent=1 // pred_check_branch
      %12 = sbr.rel (0) target = $region5
    $region4: #{tpu_custom_call.1} parent=1 // pred_region
      _
    $region5: #{tpu_custom_call.1} parent=1 // pred_fallthru
      _
    // Predicated region
    $region6: #{tpu_custom_call.1} parent=1 // pred_check
      _
    $region7: #{tpu_custom_call.1} parent=1 // pred_check_branch
      %14 = sbr.rel (0) target = $region9
    $region8: #{tpu_custom_call.1} parent=1 // pred_region
      _
    $region9: #{tpu_custom_call.1} parent=1 // pred_fallthru
      _
    %v15 = vld [vmem:[%s0] sm:$0xff]
    %v16 = vld [vmem:[%s0 + $0x8] sm:$0xff]
    %v17 = vld [vmem:[%s0 + $0x10] sm:$0xff]
    %v18 = vld [vmem:[%s0 + $0x18] sm:$0xff]
    %v19 = vld [vmem:[%s0 + $0x20] sm:$0xff]
    %v20 = vld [vmem:[%s0 + $0x28] sm:$0xff]
    %v21 = vld [vmem:[%s0 + $0x30] sm:$0xff]
    %v22 = vld [vmem:[%s0 + $0x38] sm:$0xff]
    %v23 = vld [vmem:[%s0 + $0x40] sm:$0xff]
    %v24 = vld [vmem:[%s0 + $0x48] sm:$0xff]
    %v25 = vld [vmem:[%s0 + $0x50] sm:$0xff]
    %v26 = vld [vmem:[%s0 + $0x58] sm:$0xff]
    %v27 = vld [vmem:[%s0 + $0x60] sm:$0xff]
    %v28 = vld [vmem:[%s0 + $0x68] sm:$0xff]
    %v29 = vld [vmem:[%s0 + $0x70] sm:$0xff]
    %v30 = vld [vmem:[%s0 + $0x78] sm:$0xff]
    %v31 = vld [vmem:[%s0 + $0x80] sm:$0xff]
    %v32 = vld [vmem:[%s0 + $0x88] sm:$0xff]
    %v33 = vld [vmem:[%s0 + $0x90] sm:$0xff]
    %v34 = vld [vmem:[%s0 + $0x98] sm:$0xff]
    %v35 = vld [vmem:[%s0 + $0xa0] sm:$0xff]
    %v36 = vld [vmem:[%s0 + $0xa8] sm:$0xff]
    %v37 = vld [vmem:[%s0 + $0xb0] sm:$0xff]
    %v38 = vld [vmem:[%s0 + $0xb8] sm:$0xff]
    %v39 = vld [vmem:[%s0 + $0xc0] sm:$0xff]
    %v40 = vld [vmem:[%s0 + $0xc8] sm:$0xff]
    %v41 = vld [vmem:[%s0 + $0xd0] sm:$0xff]
    %v42 = vld [vmem:[%s0 + $0xd8] sm:$0xff]
    %v43 = vld [vmem:[%s0 + $0xe0] sm:$0xff]
    %v44 = vld [vmem:[%s0 + $0xe8] sm:$0xff]
    %v45 = vld [vmem:[%s0 + $0xf0] sm:$0xff]
    %v46 = vld [vmem:[%s0 + $0xf8] sm:$0xff]
    %v47 = vld [vmem:[%s0 + $0x100] sm:$0xff]
    %v48 = vld [vmem:[%s0 + $0x108] sm:$0xff]
    %v49 = vld [vmem:[%s0 + $0x110] sm:$0xff]
    %v50 = vld [vmem:[%s0 + $0x118] sm:$0xff]
    %v51 = vld [vmem:[%s0 + $0x120] sm:$0xff]
    %v52 = vld [vmem:[%s0 + $0x128] sm:$0xff]
    %v53 = vld [vmem:[%s0 + $0x130] sm:$0xff]
    %v54 = vld [vmem:[%s0 + $0x138] sm:$0xff]
    %v55 = vld [vmem:[%s0 + $0x140] sm:$0xff]
    %v56 = vld [vmem:[%s0 + $0x148] sm:$0xff]
    %v57 = vld [vmem:[%s0 + $0x150] sm:$0xff]
    %v58 = vld [vmem:[%s0 + $0x158] sm:$0xff]
    %v59 = vld [vmem:[%s0 + $0x160] sm:$0xff]
    %v60 = vld [vmem:[%s0 + $0x168] sm:$0xff]
    %v61 = vld [vmem:[%s0 + $0x170] sm:$0xff]
    %v62 = vld [vmem:[%s0 + $0x178] sm:$0xff]
    %v63 = vld [vmem:[%s0 + $0x180] sm:$0xff]
    %v64 = vld [vmem:[%s0 + $0x188] sm:$0xff]
    %v65 = vld [vmem:[%s0 + $0x190] sm:$0xff]
    %v66 = vld [vmem:[%s0 + $0x198] sm:$0xff]
    %v67 = vld [vmem:[%s0 + $0x1a0] sm:$0xff]
    %v68 = vld [vmem:[%s0 + $0x1a8] sm:$0xff]
    %v69 = vld [vmem:[%s0 + $0x1b0] sm:$0xff]
    %v70 = vld [vmem:[%s0 + $0x1b8] sm:$0xff]
    %v71 = vld [vmem:[%s0 + $0x1c0] sm:$0xff]
    %v72 = vld [vmem:[%s0 + $0x1c8] sm:$0xff]
    %v73 = vld [vmem:[%s0 + $0x1d0] sm:$0xff]
    %v74 = vld [vmem:[%s0 + $0x1d8] sm:$0xff]
    %v75 = vld [vmem:[%s0 + $0x1e0] sm:$0xff]
    %v76 = vld [vmem:[%s0 + $0x1e8] sm:$0xff]
    %v77 = vld [vmem:[%s0 + $0x1f0] sm:$0xff]
    %v78 = vld [vmem:[%s0 + $0x1f8] sm:$0xff]
    %v79 = vld [vmem:[%s1] sm:$0xff]
    %v80 = vld [vmem:[%s1 + $0x8] sm:$0xff]
    %v81 = vld [vmem:[%s1 + $0x10] sm:$0xff]
    %v82 = vld [vmem:[%s1 + $0x18] sm:$0xff]
    %vm83 = vcmask 261120
    %v85 = vsel %vm83, %v15, 0
    %v88 = vsel %vm83, %v16, 0
    %v91 = vsel %vm83, %v17, 0
    %v94 = vsel %vm83, %v18, 0
    %v97 = vsel %vm83, %v19, 0
    %v100 = vsel %vm83, %v20, 0
    %v103 = vsel %vm83, %v21, 0
    %v106 = vsel %vm83, %v22, 0
    %v109 = vsel %vm83, %v23, 0
    %v112 = vsel %vm83, %v24, 0
    %v115 = vsel %vm83, %v25, 0
    %v118 = vsel %vm83, %v26, 0
    %v121 = vsel %vm83, %v27, 0
    %v124 = vsel %vm83, %v28, 0
    %v127 = vsel %vm83, %v29, 0
    %v130 = vsel %vm83, %v30, 0
    %v133 = vsel %vm83, %v31, 0
    %v136 = vsel %vm83, %v32, 0
    %v139 = vsel %vm83, %v33, 0
    %v142 = vsel %vm83, %v34, 0
    %v145 = vsel %vm83, %v35, 0
    %v148 = vsel %vm83, %v36, 0
    %v151 = vsel %vm83, %v37, 0
    %v154 = vsel %vm83, %v38, 0
    %v157 = vsel %vm83, %v39, 0
    %v160 = vsel %vm83, %v40, 0
    %v163 = vsel %vm83, %v41, 0
    %v166 = vsel %vm83, %v42, 0
    %v169 = vsel %vm83, %v43, 0
    %v172 = vsel %vm83, %v44, 0
    %v175 = vsel %vm83, %v45, 0
    %v178 = vsel %vm83, %v46, 0
    %v181 = vsel %vm83, %v47, 0
    %v184 = vsel %vm83, %v48, 0
    %v187 = vsel %vm83, %v49, 0
    %v190 = vsel %vm83, %v50, 0
    %v193 = vsel %vm83, %v51, 0
    %v196 = vsel %vm83, %v52, 0
    %v199 = vsel %vm83, %v53, 0
    %v202 = vsel %vm83, %v54, 0
    %v205 = vsel %vm83, %v55, 0
    %v208 = vsel %vm83, %v56, 0
    %v211 = vsel %vm83, %v57, 0
    %v214 = vsel %vm83, %v58, 0
    %v217 = vsel %vm83, %v59, 0
    %v220 = vsel %vm83, %v60, 0
    %v223 = vsel %vm83, %v61, 0
    %v226 = vsel %vm83, %v62, 0
    %v229 = vsel %vm83, %v63, 0
    %v232 = vsel %vm83, %v64, 0
    %v235 = vsel %vm83, %v65, 0
    %v238 = vsel %vm83, %v66, 0
    %v241 = vsel %vm83, %v67, 0
    %v244 = vsel %vm83, %v68, 0
    %v247 = vsel %vm83, %v69, 0
    %v250 = vsel %vm83, %v70, 0
    %v253 = vsel %vm83, %v71, 0
    %v256 = vsel %vm83, %v72, 0
    %v259 = vsel %vm83, %v73, 0
    %v262 = vsel %vm83, %v74, 0
    %v265 = vsel %vm83, %v75, 0
    %v268 = vsel %vm83, %v76, 0
    %v271 = vsel %vm83, %v77, 0
    %v274 = vsel %vm83, %v78, 0
    %276 = vmatpush.msra.mxu0 0.0
    %277 = vmatpush.msra.mxu0 0.0
    %278 = vmatpush.msra.mxu0 0.0
    %279 = vmatpush.msra.mxu0 0.0
    %280 = vmatpush.msra.mxu0 0.0
    %281 = vmatpush.msra.mxu0 0.0
    %282 = vmatpush.msra.mxu0 0.0
    %283 = vmatpush.msra.mxu0 0.0
    %284 = vmatpush.msra.mxu0 0.0
    %285 = vmatpush.msra.mxu0 0.0
    %286 = vmatpush.msra.mxu0 0.0
    %287 = vmatpush.msra.mxu0 0.0
    %288 = vmatpush.msra.mxu0 %v82
    %289 = vmatpush.msra.mxu0 %v81
    %290 = vmatpush.msra.mxu0 %v80
    %291 = vmatpush.msra.mxu0 %v79
    %292 = vmatmul.f32.gmra.mxu0 %v85
    %v293 = vpop.f32.mrf.mxu0
    %v294 = vadd.f32 0.0, %v293
    %295 = vmatmul.f32.gmra.mxu0 %v88
    %v296 = vpop.f32.mrf.mxu0
    %v297 = vadd.f32 0.0, %v296
    %298 = vmatmul.f32.gmra.mxu0 %v91
    %v299 = vpop.f32.mrf.mxu0
    %v300 = vadd.f32 0.0, %v299
    %301 = vmatmul.f32.gmra.mxu0 %v94
    %v302 = vpop.f32.mrf.mxu0
    %v303 = vadd.f32 0.0, %v302
    %304 = vmatmul.f32.gmra.mxu0 %v97
    %v305 = vpop.f32.mrf.mxu0
    %v306 = vadd.f32 0.0, %v305
    %307 = vmatmul.f32.gmra.mxu0 %v100
    %v308 = vpop.f32.mrf.mxu0
    %v309 = vadd.f32 0.0, %v308
    %310 = vmatmul.f32.gmra.mxu0 %v103
    %v311 = vpop.f32.mrf.mxu0
    %v312 = vadd.f32 0.0, %v311
    %313 = vmatmul.f32.gmra.mxu0 %v106
    %v314 = vpop.f32.mrf.mxu0
    %v315 = vadd.f32 0.0, %v314
    %316 = vmatmul.f32.gmra.mxu0 %v109
    %v317 = vpop.f32.mrf.mxu0
    %v318 = vadd.f32 0.0, %v317
    %319 = vmatmul.f32.gmra.mxu0 %v112
    %v320 = vpop.f32.mrf.mxu0
    %v321 = vadd.f32 0.0, %v320
    %322 = vmatmul.f32.gmra.mxu0 %v115
    %v323 = vpop.f32.mrf.mxu0
    %v324 = vadd.f32 0.0, %v323
    %325 = vmatmul.f32.gmra.mxu0 %v118
    %v326 = vpop.f32.mrf.mxu0
    %v327 = vadd.f32 0.0, %v326
    %328 = vmatmul.f32.gmra.mxu0 %v121
    %v329 = vpop.f32.mrf.mxu0
    %v330 = vadd.f32 0.0, %v329
    %331 = vmatmul.f32.gmra.mxu0 %v124
    %v332 = vpop.f32.mrf.mxu0
    %v333 = vadd.f32 0.0, %v332
    %334 = vmatmul.f32.gmra.mxu0 %v127
    %v335 = vpop.f32.mrf.mxu0
    %v336 = vadd.f32 0.0, %v335
    %337 = vmatmul.f32.gmra.mxu0 %v130
    %v338 = vpop.f32.mrf.mxu0
    %v339 = vadd.f32 0.0, %v338
    %340 = vmatmul.f32.gmra.mxu0 %v133
    %v341 = vpop.f32.mrf.mxu0
    %v342 = vadd.f32 0.0, %v341
    %343 = vmatmul.f32.gmra.mxu0 %v136
    %v344 = vpop.f32.mrf.mxu0
    %v345 = vadd.f32 0.0, %v344
    %346 = vmatmul.f32.gmra.mxu0 %v139
    %v347 = vpop.f32.mrf.mxu0
    %v348 = vadd.f32 0.0, %v347
    %349 = vmatmul.f32.gmra.mxu0 %v142
    %v350 = vpop.f32.mrf.mxu0
    %v351 = vadd.f32 0.0, %v350
    %352 = vmatmul.f32.gmra.mxu0 %v145
    %v353 = vpop.f32.mrf.mxu0
    %v354 = vadd.f32 0.0, %v353
    %355 = vmatmul.f32.gmra.mxu0 %v148
    %v356 = vpop.f32.mrf.mxu0
    %v357 = vadd.f32 0.0, %v356
    %358 = vmatmul.f32.gmra.mxu0 %v151
    %v359 = vpop.f32.mrf.mxu0
    %v360 = vadd.f32 0.0, %v359
    %361 = vmatmul.f32.gmra.mxu0 %v154
    %v362 = vpop.f32.mrf.mxu0
    %v363 = vadd.f32 0.0, %v362
    %364 = vmatmul.f32.gmra.mxu0 %v157
    %v365 = vpop.f32.mrf.mxu0
    %v366 = vadd.f32 0.0, %v365
    %367 = vmatmul.f32.gmra.mxu0 %v160
    %v368 = vpop.f32.mrf.mxu0
    %v369 = vadd.f32 0.0, %v368
    %370 = vmatmul.f32.gmra.mxu0 %v163
    %v371 = vpop.f32.mrf.mxu0
    %v372 = vadd.f32 0.0, %v371
    %373 = vmatmul.f32.gmra.mxu0 %v166
    %v374 = vpop.f32.mrf.mxu0
    %v375 = vadd.f32 0.0, %v374
    %376 = vmatmul.f32.gmra.mxu0 %v169
    %v377 = vpop.f32.mrf.mxu0
    %v378 = vadd.f32 0.0, %v377
    %379 = vmatmul.f32.gmra.mxu0 %v172
    %v380 = vpop.f32.mrf.mxu0
    %v381 = vadd.f32 0.0, %v380
    %382 = vmatmul.f32.gmra.mxu0 %v175
    %v383 = vpop.f32.mrf.mxu0
    %v384 = vadd.f32 0.0, %v383
    %385 = vmatmul.f32.gmra.mxu0 %v178
    %v386 = vpop.f32.mrf.mxu0
    %v387 = vadd.f32 0.0, %v386
    %388 = vmatmul.f32.gmra.mxu0 %v181
    %v389 = vpop.f32.mrf.mxu0
    %v390 = vadd.f32 0.0, %v389
    %391 = vmatmul.f32.gmra.mxu0 %v184
    %v392 = vpop.f32.mrf.mxu0
    %v393 = vadd.f32 0.0, %v392
    %394 = vmatmul.f32.gmra.mxu0 %v187
    %v395 = vpop.f32.mrf.mxu0
    %v396 = vadd.f32 0.0, %v395
    %397 = vmatmul.f32.gmra.mxu0 %v190
    %v398 = vpop.f32.mrf.mxu0
    %v399 = vadd.f32 0.0, %v398
    %400 = vmatmul.f32.gmra.mxu0 %v193
    %v401 = vpop.f32.mrf.mxu0
    %v402 = vadd.f32 0.0, %v401
    %403 = vmatmul.f32.gmra.mxu0 %v196
    %v404 = vpop.f32.mrf.mxu0
    %v405 = vadd.f32 0.0, %v404
    %406 = vmatmul.f32.gmra.mxu0 %v199
    %v407 = vpop.f32.mrf.mxu0
    %v408 = vadd.f32 0.0, %v407
    %409 = vmatmul.f32.gmra.mxu0 %v202
    %v410 = vpop.f32.mrf.mxu0
    %v411 = vadd.f32 0.0, %v410
    %412 = vmatmul.f32.gmra.mxu0 %v205
    %v413 = vpop.f32.mrf.mxu0
    %v414 = vadd.f32 0.0, %v413
    %415 = vmatmul.f32.gmra.mxu0 %v208
    %v416 = vpop.f32.mrf.mxu0
    %v417 = vadd.f32 0.0, %v416
    %418 = vmatmul.f32.gmra.mxu0 %v211
    %v419 = vpop.f32.mrf.mxu0
    %v420 = vadd.f32 0.0, %v419
    %421 = vmatmul.f32.gmra.mxu0 %v214
    %v422 = vpop.f32.mrf.mxu0
    %v423 = vadd.f32 0.0, %v422
    %424 = vmatmul.f32.gmra.mxu0 %v217
    %v425 = vpop.f32.mrf.mxu0
    %v426 = vadd.f32 0.0, %v425
    %427 = vmatmul.f32.gmra.mxu0 %v220
    %v428 = vpop.f32.mrf.mxu0
    %v429 = vadd.f32 0.0, %v428
    %430 = vmatmul.f32.gmra.mxu0 %v223
    %v431 = vpop.f32.mrf.mxu0
    %v432 = vadd.f32 0.0, %v431
    %433 = vmatmul.f32.gmra.mxu0 %v226
    %v434 = vpop.f32.mrf.mxu0
    %v435 = vadd.f32 0.0, %v434
    %436 = vmatmul.f32.gmra.mxu0 %v229
    %v437 = vpop.f32.mrf.mxu0
    %v438 = vadd.f32 0.0, %v437
    %439 = vmatmul.f32.gmra.mxu0 %v232
    %v440 = vpop.f32.mrf.mxu0
    %v441 = vadd.f32 0.0, %v440
    %442 = vmatmul.f32.gmra.mxu0 %v235
    %v443 = vpop.f32.mrf.mxu0
    %v444 = vadd.f32 0.0, %v443
    %445 = vmatmul.f32.gmra.mxu0 %v238
    %v446 = vpop.f32.mrf.mxu0
    %v447 = vadd.f32 0.0, %v446
    %448 = vmatmul.f32.gmra.mxu0 %v241
    %v449 = vpop.f32.mrf.mxu0
    %v450 = vadd.f32 0.0, %v449
    %451 = vmatmul.f32.gmra.mxu0 %v244
    %v452 = vpop.f32.mrf.mxu0
    %v453 = vadd.f32 0.0, %v452
    %454 = vmatmul.f32.gmra.mxu0 %v247
    %v455 = vpop.f32.mrf.mxu0
    %v456 = vadd.f32 0.0, %v455
    %457 = vmatmul.f32.gmra.mxu0 %v250
    %v458 = vpop.f32.mrf.mxu0
    %v459 = vadd.f32 0.0, %v458
    %460 = vmatmul.f32.gmra.mxu0 %v253
    %v461 = vpop.f32.mrf.mxu0
    %v462 = vadd.f32 0.0, %v461
    %463 = vmatmul.f32.gmra.mxu0 %v256
    %v464 = vpop.f32.mrf.mxu0
    %v465 = vadd.f32 0.0, %v464
    %466 = vmatmul.f32.gmra.mxu0 %v259
    %v467 = vpop.f32.mrf.mxu0
    %v468 = vadd.f32 0.0, %v467
    %469 = vmatmul.f32.gmra.mxu0 %v262
    %v470 = vpop.f32.mrf.mxu0
    %v471 = vadd.f32 0.0, %v470
    %472 = vmatmul.f32.gmra.mxu0 %v265
    %v473 = vpop.f32.mrf.mxu0
    %v474 = vadd.f32 0.0, %v473
    %475 = vmatmul.f32.gmra.mxu0 %v268
    %v476 = vpop.f32.mrf.mxu0
    %v477 = vadd.f32 0.0, %v476
    %478 = vmatmul.f32.gmra.mxu0 %v271
    %v479 = vpop.f32.mrf.mxu0
    %v480 = vadd.f32 0.0, %v479
    %481 = vmatmul.f32.gmra.mxu0 %v274
    %v482 = vpop.f32.mrf.mxu0
    %v483 = vadd.f32 0.0, %v482
    %484 = vdwg.mxu0
    %v485 = vpack.c.bf16 %v294, %v294
    %v486 = vpack.c.bf16 %v297, %v297
    %v487 = vpack.c.bf16 %v300, %v300
    %v488 = vpack.c.bf16 %v303, %v303
    %v489 = vpack.c.bf16 %v306, %v306
    %v490 = vpack.c.bf16 %v309, %v309
    %v491 = vpack.c.bf16 %v312, %v312
    %v492 = vpack.c.bf16 %v315, %v315
    %v493 = vpack.c.bf16 %v318, %v318
    %v494 = vpack.c.bf16 %v321, %v321
    %v495 = vpack.c.bf16 %v324, %v324
    %v496 = vpack.c.bf16 %v327, %v327
    %v497 = vpack.c.bf16 %v330, %v330
    %v498 = vpack.c.bf16 %v333, %v333
    %v499 = vpack.c.bf16 %v336, %v336
    %v500 = vpack.c.bf16 %v339, %v339
    %v501 = vpack.c.bf16 %v342, %v342
    %v502 = vpack.c.bf16 %v345, %v345
    %v503 = vpack.c.bf16 %v348, %v348
    %v504 = vpack.c.bf16 %v351, %v351
    %v505 = vpack.c.bf16 %v354, %v354
    %v506 = vpack.c.bf16 %v357, %v357
    %v507 = vpack.c.bf16 %v360, %v360
    %v508 = vpack.c.bf16 %v363, %v363
    %v509 = vpack.c.bf16 %v366, %v366
    %v510 = vpack.c.bf16 %v369, %v369
    %v511 = vpack.c.bf16 %v372, %v372
    %v512 = vpack.c.bf16 %v375, %v375
    %v513 = vpack.c.bf16 %v378, %v378
    %v514 = vpack.c.bf16 %v381, %v381
    %v515 = vpack.c.bf16 %v384, %v384
    %v516 = vpack.c.bf16 %v387, %v387
    %v517 = vpack.c.bf16 %v390, %v390
    %v518 = vpack.c.bf16 %v393, %v393
    %v519 = vpack.c.bf16 %v396, %v396
    %v520 = vpack.c.bf16 %v399, %v399
    %v521 = vpack.c.bf16 %v402, %v402
    %v522 = vpack.c.bf16 %v405, %v405
    %v523 = vpack.c.bf16 %v408, %v408
    %v524 = vpack.c.bf16 %v411, %v411
    %v525 = vpack.c.bf16 %v414, %v414
    %v526 = vpack.c.bf16 %v417, %v417
    %v527 = vpack.c.bf16 %v420, %v420
    %v528 = vpack.c.bf16 %v423, %v423
    %v529 = vpack.c.bf16 %v426, %v426
    %v530 = vpack.c.bf16 %v429, %v429
    %v531 = vpack.c.bf16 %v432, %v432
    %v532 = vpack.c.bf16 %v435, %v435
    %v533 = vpack.c.bf16 %v438, %v438
    %v534 = vpack.c.bf16 %v441, %v441
    %v535 = vpack.c.bf16 %v444, %v444
    %v536 = vpack.c.bf16 %v447, %v447
    %v537 = vpack.c.bf16 %v450, %v450
    %v538 = vpack.c.bf16 %v453, %v453
    %v539 = vpack.c.bf16 %v456, %v456
    %v540 = vpack.c.bf16 %v459, %v459
    %v541 = vpack.c.bf16 %v462, %v462
    %v542 = vpack.c.bf16 %v465, %v465
    %v543 = vpack.c.bf16 %v468, %v468
    %v544 = vpack.c.bf16 %v471, %v471
    %v545 = vpack.c.bf16 %v474, %v474
    %v546 = vpack.c.bf16 %v477, %v477
    %v547 = vpack.c.bf16 %v480, %v480
    %v548 = vpack.c.bf16 %v483, %v483
    %549 = vst [vmem:[#allocation2] sm:$0xf] %v485
    %550 = vst [vmem:[#allocation2 + $0x4] sm:$0xf] %v486
    %551 = vst [vmem:[#allocation2 + $0x8] sm:$0xf] %v487
    %552 = vst [vmem:[#allocation2 + $0xc] sm:$0xf] %v488
    %553 = vst [vmem:[#allocation2 + $0x10] sm:$0xf] %v489
    %554 = vst [vmem:[#allocation2 + $0x14] sm:$0xf] %v490
    %555 = vst [vmem:[#allocation2 + $0x18] sm:$0xf] %v491
    %556 = vst [vmem:[#allocation2 + $0x1c] sm:$0xf] %v492
    %557 = vst [vmem:[#allocation2 + $0x20] sm:$0xf] %v493
    %558 = vst [vmem:[#allocation2 + $0x24] sm:$0xf] %v494
    %559 = vst [vmem:[#allocation2 + $0x28] sm:$0xf] %v495
    %560 = vst [vmem:[#allocation2 + $0x2c] sm:$0xf] %v496
    %561 = vst [vmem:[#allocation2 + $0x30] sm:$0xf] %v497
    %562 = vst [vmem:[#allocation2 + $0x34] sm:$0xf] %v498
    %563 = vst [vmem:[#allocation2 + $0x38] sm:$0xf] %v499
    %564 = vst [vmem:[#allocation2 + $0x3c] sm:$0xf] %v500
    %565 = vst [vmem:[#allocation2 + $0x40] sm:$0xf] %v501
    %566 = vst [vmem:[#allocation2 + $0x44] sm:$0xf] %v502
    %567 = vst [vmem:[#allocation2 + $0x48] sm:$0xf] %v503
    %568 = vst [vmem:[#allocation2 + $0x4c] sm:$0xf] %v504
    %569 = vst [vmem:[#allocation2 + $0x50] sm:$0xf] %v505
    %570 = vst [vmem:[#allocation2 + $0x54] sm:$0xf] %v506
    %571 = vst [vmem:[#allocation2 + $0x58] sm:$0xf] %v507
    %572 = vst [vmem:[#allocation2 + $0x5c] sm:$0xf] %v508
    %573 = vst [vmem:[#allocation2 + $0x60] sm:$0xf] %v509
    %574 = vst [vmem:[#allocation2 + $0x64] sm:$0xf] %v510
    %575 = vst [vmem:[#allocation2 + $0x68] sm:$0xf] %v511
    %576 = vst [vmem:[#allocation2 + $0x6c] sm:$0xf] %v512
    %577 = vst [vmem:[#allocation2 + $0x70] sm:$0xf] %v513
    %578 = vst [vmem:[#allocation2 + $0x74] sm:$0xf] %v514
    %579 = vst [vmem:[#allocation2 + $0x78] sm:$0xf] %v515
    %580 = vst [vmem:[#allocation2 + $0x7c] sm:$0xf] %v516
    %581 = vst [vmem:[#allocation2 + $0x80] sm:$0xf] %v517
    %582 = vst [vmem:[#allocation2 + $0x84] sm:$0xf] %v518
    %583 = vst [vmem:[#allocation2 + $0x88] sm:$0xf] %v519
    %584 = vst [vmem:[#allocation2 + $0x8c] sm:$0xf] %v520
    %585 = vst [vmem:[#allocation2 + $0x90] sm:$0xf] %v521
    %586 = vst [vmem:[#allocation2 + $0x94] sm:$0xf] %v522
    %587 = vst [vmem:[#allocation2 + $0x98] sm:$0xf] %v523
    %588 = vst [vmem:[#allocation2 + $0x9c] sm:$0xf] %v524
    %589 = vst [vmem:[#allocation2 + $0xa0] sm:$0xf] %v525
    %590 = vst [vmem:[#allocation2 + $0xa4] sm:$0xf] %v526
    %591 = vst [vmem:[#allocation2 + $0xa8] sm:$0xf] %v527
    %592 = vst [vmem:[#allocation2 + $0xac] sm:$0xf] %v528
    %593 = vst [vmem:[#allocation2 + $0xb0] sm:$0xf] %v529
    %594 = vst [vmem:[#allocation2 + $0xb4] sm:$0xf] %v530
    %595 = vst [vmem:[#allocation2 + $0xb8] sm:$0xf] %v531
    %596 = vst [vmem:[#allocation2 + $0xbc] sm:$0xf] %v532
    %597 = vst [vmem:[#allocation2 + $0xc0] sm:$0xf] %v533
    %598 = vst [vmem:[#allocation2 + $0xc4] sm:$0xf] %v534
    %599 = vst [vmem:[#allocation2 + $0xc8] sm:$0xf] %v535
    %600 = vst [vmem:[#allocation2 + $0xcc] sm:$0xf] %v536
    %601 = vst [vmem:[#allocation2 + $0xd0] sm:$0xf] %v537
    %602 = vst [vmem:[#allocation2 + $0xd4] sm:$0xf] %v538
    %603 = vst [vmem:[#allocation2 + $0xd8] sm:$0xf] %v539
    %604 = vst [vmem:[#allocation2 + $0xdc] sm:$0xf] %v540
    %605 = vst [vmem:[#allocation2 + $0xe0] sm:$0xf] %v541
    %606 = vst [vmem:[#allocation2 + $0xe4] sm:$0xf] %v542
    %607 = vst [vmem:[#allocation2 + $0xe8] sm:$0xf] %v543
    %608 = vst [vmem:[#allocation2 + $0xec] sm:$0xf] %v544
    %609 = vst [vmem:[#allocation2 + $0xf0] sm:$0xf] %v545
    %610 = vst [vmem:[#allocation2 + $0xf4] sm:$0xf] %v546
    %611 = vst [vmem:[#allocation2 + $0xf8] sm:$0xf] %v547
    %612 = vst [vmem:[#allocation2 + $0xfc] sm:$0xf] %v548
    %613 = vst [vmem:[#allocation4] sm:$0xff] %v294
    %614 = vst [vmem:[#allocation4 + $0x8] sm:$0xff] %v297
    %615 = vst [vmem:[#allocation4 + $0x10] sm:$0xff] %v300
    %616 = vst [vmem:[#allocation4 + $0x18] sm:$0xff] %v303
    %617 = vst [vmem:[#allocation4 + $0x20] sm:$0xff] %v306
    %618 = vst [vmem:[#allocation4 + $0x28] sm:$0xff] %v309
    %619 = vst [vmem:[#allocation4 + $0x30] sm:$0xff] %v312
    %620 = vst [vmem:[#allocation4 + $0x38] sm:$0xff] %v315
    %621 = vst [vmem:[#allocation4 + $0x40] sm:$0xff] %v318
    %622 = vst [vmem:[#allocation4 + $0x48] sm:$0xff] %v321
    %623 = vst [vmem:[#allocation4 + $0x50] sm:$0xff] %v324
    %624 = vst [vmem:[#allocation4 + $0x58] sm:$0xff] %v327
    %625 = vst [vmem:[#allocation4 + $0x60] sm:$0xff] %v330
    %626 = vst [vmem:[#allocation4 + $0x68] sm:$0xff] %v333
    %627 = vst [vmem:[#allocation4 + $0x70] sm:$0xff] %v336
    %628 = vst [vmem:[#allocation4 + $0x78] sm:$0xff] %v339
    %629 = vst [vmem:[#allocation4 + $0x80] sm:$0xff] %v342
    %630 = vst [vmem:[#allocation4 + $0x88] sm:$0xff] %v345
    %631 = vst [vmem:[#allocation4 + $0x90] sm:$0xff] %v348
    %632 = vst [vmem:[#allocation4 + $0x98] sm:$0xff] %v351
    %633 = vst [vmem:[#allocation4 + $0xa0] sm:$0xff] %v354
    %634 = vst [vmem:[#allocation4 + $0xa8] sm:$0xff] %v357
    %635 = vst [vmem:[#allocation4 + $0xb0] sm:$0xff] %v360
    %636 = vst [vmem:[#allocation4 + $0xb8] sm:$0xff] %v363
    %637 = vst [vmem:[#allocation4 + $0xc0] sm:$0xff] %v366
    %638 = vst [vmem:[#allocation4 + $0xc8] sm:$0xff] %v369
    %639 = vst [vmem:[#allocation4 + $0xd0] sm:$0xff] %v372
    %640 = vst [vmem:[#allocation4 + $0xd8] sm:$0xff] %v375
    %641 = vst [vmem:[#allocation4 + $0xe0] sm:$0xff] %v378
    %642 = vst [vmem:[#allocation4 + $0xe8] sm:$0xff] %v381
    %643 = vst [vmem:[#allocation4 + $0xf0] sm:$0xff] %v384
    %644 = vst [vmem:[#allocation4 + $0xf8] sm:$0xff] %v387
    %645 = vst [vmem:[#allocation4 + $0x100] sm:$0xff] %v390
    %646 = vst [vmem:[#allocation4 + $0x108] sm:$0xff] %v393
    %647 = vst [vmem:[#allocation4 + $0x110] sm:$0xff] %v396
    %648 = vst [vmem:[#allocation4 + $0x118] sm:$0xff] %v399
    %649 = vst [vmem:[#allocation4 + $0x120] sm:$0xff] %v402
    %650 = vst [vmem:[#allocation4 + $0x128] sm:$0xff] %v405
    %651 = vst [vmem:[#allocation4 + $0x130] sm:$0xff] %v408
    %652 = vst [vmem:[#allocation4 + $0x138] sm:$0xff] %v411
    %653 = vst [vmem:[#allocation4 + $0x140] sm:$0xff] %v414
    %654 = vst [vmem:[#allocation4 + $0x148] sm:$0xff] %v417
    %655 = vst [vmem:[#allocation4 + $0x150] sm:$0xff] %v420
    %656 = vst [vmem:[#allocation4 + $0x158] sm:$0xff] %v423
    %657 = vst [vmem:[#allocation4 + $0x160] sm:$0xff] %v426
    %658 = vst [vmem:[#allocation4 + $0x168] sm:$0xff] %v429
    %659 = vst [vmem:[#allocation4 + $0x170] sm:$0xff] %v432
    %660 = vst [vmem:[#allocation4 + $0x178] sm:$0xff] %v435
    %661 = vst [vmem:[#allocation4 + $0x180] sm:$0xff] %v438
    %662 = vst [vmem:[#allocation4 + $0x188] sm:$0xff] %v441
    %663 = vst [vmem:[#allocation4 + $0x190] sm:$0xff] %v444
    %664 = vst [vmem:[#allocation4 + $0x198] sm:$0xff] %v447
    %665 = vst [vmem:[#allocation4 + $0x1a0] sm:$0xff] %v450
    %666 = vst [vmem:[#allocation4 + $0x1a8] sm:$0xff] %v453
    %667 = vst [vmem:[#allocation4 + $0x1b0] sm:$0xff] %v456
    %668 = vst [vmem:[#allocation4 + $0x1b8] sm:$0xff] %v459
    %669 = vst [vmem:[#allocation4 + $0x1c0] sm:$0xff] %v462
    %670 = vst [vmem:[#allocation4 + $0x1c8] sm:$0xff] %v465
    %671 = vst [vmem:[#allocation4 + $0x1d0] sm:$0xff] %v468
    %672 = vst [vmem:[#allocation4 + $0x1d8] sm:$0xff] %v471
    %673 = vst [vmem:[#allocation4 + $0x1e0] sm:$0xff] %v474
    %674 = vst [vmem:[#allocation4 + $0x1e8] sm:$0xff] %v477
    %675 = vst [vmem:[#allocation4 + $0x1f0] sm:$0xff] %v480
    %676 = vst [vmem:[#allocation4 + $0x1f8] sm:$0xff] %v483
    // Predicated region
    $region10: #{tpu_custom_call.1} parent=1 // pred_check
      _
    $region11: #{tpu_custom_call.1} parent=1 // pred_check_branch
      %678 = sbr.rel (0) target = $region13
    $region12: #{tpu_custom_call.1} parent=1 // pred_region
      %680 = vsyncadd [#allocation3], 0
      %s681 = sshll.u32 [#allocation2], 4
      %s682 = int_to_ptr.vmem [resolvable:$true] %s681
      %s683 = sshll.u32 %s2, 4
      %s684 = int_to_ptr.hbm [resolvable:$true] %s683
      %689 = dma.vmem_to_hbm [thread:$0]  %s682, 4096, %s684, [#allocation3], 64, 64, 4
    $region13: #{tpu_custom_call.1} parent=1 // pred_fallthru
      _
    // Predicated region
    $region14: #{tpu_custom_call.1} parent=1 // pred_check
      _
    $region15: #{tpu_custom_call.1} parent=1 // pred_check_branch
      %691 = sbr.rel (0) target = $region17
    $region16: #{tpu_custom_call.1} parent=1 // pred_region
      %693 = vsyncadd [#allocation5], 0
      %s694 = sshll.u32 [#allocation4], 4
      %s695 = int_to_ptr.vmem [resolvable:$true] %s694
      %s696 = sshll.u32 %s3, 4
      %s697 = int_to_ptr.hbm [resolvable:$true] %s696
      %702 = dma.vmem_to_hbm [thread:$0]  %s695, 8192, %s697, [#allocation5], 128, 128, 8
    $region17: #{tpu_custom_call.1} parent=1 // pred_fallthru
      _
    // Predicated region
    $region18: #{tpu_custom_call.1} parent=1 // pred_check
      _
    $region19: #{tpu_custom_call.1} parent=1 // pred_check_branch
      %704 = sbr.rel (0) target = $region21
    $region20: #{tpu_custom_call.1} parent=1 // pred_region
      %706 = dma.done [#allocation3], 4096
    $region21: #{tpu_custom_call.1} parent=1 // pred_fallthru
      _
    // Predicated region
    $region22: #{tpu_custom_call.1} parent=1 // pred_check
      _
    $region23: #{tpu_custom_call.1} parent=1 // pred_check_branch
      %708 = sbr.rel (0) target = $region25
    $region24: #{tpu_custom_call.1} parent=1 // pred_region
      %710 = dma.done [#allocation5], 8192
    $region25: #{tpu_custom_call.1} parent=1 // pred_fallthru
      _
    %711 = vsyncpa [#allocation3], 1
    %712 = vsyncpa [#allocation5], 1

</llo_original>
